<compile_context>
chip_gen: v7x
topology: tpu7x:2x2x1
jax: 0.10.0
libtpu: 0.0.40
codegen_flags: <defaults>
</compile_context>

<pallas_src>
import functools

import jax
import jax.numpy as jnp
from jax import lax
from jax.experimental import pallas as pl
from jax.experimental.pallas import tpu as pltpu


def _round_up(x, m):
    return (x + m - 1) // m * m


_FAST_PATH_TABLE_BYTES = 2 * 1024 * 1024    # resident-VMEM table threshold
_FAST_PATH_ONEHOT_BYTES = 8 * 1024 * 1024   # bound on the in-kernel one-hot temp
_VMEM_CAP_BYTES = 48 * 1024 * 1024          # headroom for v7x's 64 MiB VMEM


# ---------------------------------------------------------------------------
# Fast path: vocabulary small enough that the table lives in VMEM.
# Gather + mean-pool fused into one MXU matmul: counts @ table.
# ---------------------------------------------------------------------------
def _vmem_table_kernel(idx_ref, table_ref, w_ref, b_ref, o_ref, *, tb, seq, v_pad):
    idx = idx_ref[...]                                               # (TB*S, 1) int32
    iota_v = lax.broadcasted_iota(jnp.int32, (tb * seq, v_pad), 1)
    onehot = (idx == iota_v).astype(jnp.float32)                     # (TB*S, V_pad)
    counts = jnp.sum(onehot.reshape(tb, seq, v_pad), axis=1)         # (TB, V_pad)
    # mean_s table[idx[b, s]]  ==  (1/S) * counts[b, :] @ table
    pooled = jnp.dot(counts.astype(table_ref.dtype), table_ref[...],
                     preferred_element_type=jnp.float32) * (1.0 / seq)
    out = jnp.dot(pooled.astype(w_ref.dtype), w_ref[...],
                  preferred_element_type=jnp.float32)
    out = out + b_ref[...].astype(jnp.float32)
    o_ref[...] = jnp.tanh(out).astype(o_ref.dtype)


# ---------------------------------------------------------------------------
# Fallback: large vocabulary.  Table stays in HBM; rows are DMA-gathered in
# S chunks of TB rows (one sequence position per chunk), double-buffered, with
# the mean-pool fused into the wait phase.  Only 2 DMA semaphores are used.
# ---------------------------------------------------------------------------
def _hbm_gather_kernel(idx_ref, table_ref, w_ref, b_ref, o_ref,
                       gbuf, pooled, sems, *, tb, seq):
    bt = pl.program_id(0)
    row_base = bt * tb

    def issue_chunk(s, slot):
        # Gather token position `s` of every batch row in this tile.
        @pl.loop(0, tb)
        def _(r):
            tok = idx_ref[(row_base + r) * seq + s]
            pltpu.make_async_copy(table_ref.at[tok], gbuf.at[slot, r],
                                  sems.at[slot]).start()

    def wait_chunk(s, slot):
        # All copies of a chunk share one semaphore; each wait consumes one
        # row-sized completion (descriptor rebuilt from the true source row).
        @pl.loop(0, tb)
        def _(r):
            tok = idx_ref[(row_base + r) * seq + s]
            pltpu.make_async_copy(table_ref.at[tok], gbuf.at[slot, r],
                                  sems.at[slot]).wait()

    issue_chunk(0, 0)
    pooled[...] = jnp.zeros_like(pooled)

    @pl.loop(0, seq)
    def _(s):
        slot = s & 1

        @pl.when(s + 1 < seq)
        def _():                               # prefetch next chunk into other slot
            issue_chunk(s + 1, 1 - slot)

        wait_chunk(s, slot)
        pooled[...] += gbuf[slot].astype(jnp.float32)   # fused mean-pool (VPU add)

    mean = pooled[...] * (1.0 / seq)
    out = jnp.dot(mean.astype(w_ref.dtype), w_ref[...],
                  preferred_element_type=jnp.float32)
    out = out + b_ref[...].astype(jnp.float32)
    o_ref[...] = jnp.tanh(out).astype(o_ref.dtype)


# ---------------------------------------------------------------------------
# Parameter preparation (done ONCE, outside the per-call hot path).
# ---------------------------------------------------------------------------
def prepare_imagenet_params(emb_table, proj_w, proj_b, *,
                            param_dtype=jnp.float32,
                            fast_path_table_bytes=_FAST_PATH_TABLE_BYTES):
    V, E = emb_table.shape
    E2, D = proj_w.shape
    assert E2 == E
    itemsize = jnp.dtype(param_dtype).itemsize

    E_pad = _round_up(E, 128)
    D_pad = _round_up(D, 128)

    V_pad_fast = _round_up(V, 128)
    use_vmem_table = V_pad_fast * E_pad * itemsize <= fast_path_table_bytes
    V_pad = V_pad_fast if use_vmem_table else _round_up(V, 8)

    table = jnp.pad(emb_table.astype(param_dtype),
                    ((0, V_pad - V), (0, E_pad - E)))
    w = jnp.pad(proj_w.astype(param_dtype), ((0, E_pad - E), (0, D_pad - D)))
    b = jnp.pad(proj_b.astype(param_dtype).reshape(1, D),
                ((0, 0), (0, D_pad - D)))

    meta = dict(V=V, E=E, D=D, V_pad=V_pad, E_pad=E_pad, D_pad=D_pad,
                use_vmem_table=use_vmem_table, param_dtype=param_dtype)
    return dict(table=table, w=w, b=b, meta=meta)


def imagenet_forward(x_idx, params):
    """ImageNet.forward: (B, S) int32 word indices -> (B, img_dim) f32 embedding."""
    meta = params["meta"]
    V, D = meta["V"], meta["D"]
    V_pad, E_pad, D_pad = meta["V_pad"], meta["E_pad"], meta["D_pad"]
    param_dtype = meta["param_dtype"]
    itemsize = jnp.dtype(param_dtype).itemsize

    B, S = x_idx.shape
    # Batch rows per tile: aim for the 256-wide MXU (v6e/v7x) but never exceed the
    # sublane-rounded batch (v5e's 128-wide MXU is fine with <=256 as well).
    TB = min(256, _round_up(B, 8))
    if meta["use_vmem_table"]:
        while TB > 8 and TB * S * V_pad * 4 > _FAST_PATH_ONEHOT_BYTES:
            TB //= 2
    B_pad = _round_up(B, TB)
    num_bt = B_pad // TB

    # Clamp (matches jnp.take OOB semantics); padded batch rows gather row 0 and
    # are sliced away below.
    idx = jnp.clip(x_idx.astype(jnp.int32), 0, V - 1)
    idx = jnp.pad(idx, ((0, B_pad - B), (0, 0)))

    # NOTE: for very large img_dim, add a second grid axis tiling D (and
    # single-buffer the grid-invariant weight) to bound VMEM on v7x.
    if meta["use_vmem_table"]:
        kernel = functools.partial(_vmem_table_kernel, tb=TB, seq=S, v_pad=V_pad)
        vmem_est = (2 * TB * S * 4                      # index blocks
                    + 2 * V_pad * E_pad * itemsize      # resident table
                    + 2 * E_pad * D_pad * itemsize      # proj weight
                    + 2 * D_pad * itemsize              # bias
                    + 2 * TB * D_pad * 4                # output tile
                    + TB * S * V_pad * 4                # one-hot temp
                    + TB * (V_pad + E_pad) * 4)         # counts / pooled temps
        grid_spec = pltpu.PrefetchScalarGridSpec(
            num_scalar_prefetch=0,
            grid=(num_bt,),
            in_specs=[
                pl.BlockSpec((TB * S, 1), lambda i: (i, 0)),        # indices (VMEM)
                pl.BlockSpec((V_pad, E_pad), lambda i: (0, 0)),     # table (resident)
                pl.BlockSpec((E_pad, D_pad), lambda i: (0, 0)),     # proj weight
                pl.BlockSpec((1, D_pad), lambda i: (0, 0)),         # proj bias
            ],
            out_specs=pl.BlockSpec((TB, D_pad), lambda i: (i, 0)),
        )
        operands = (idx.reshape(B_pad * S, 1),
                    params["table"], params["w"], params["b"])
    else:
        kernel = functools.partial(_hbm_gather_kernel, tb=TB, seq=S)
        vmem_est = (2 * TB * E_pad * itemsize           # chunk double buffer
                    + TB * E_pad * 4                    # pooled accumulator
                    + 2 * E_pad * D_pad * itemsize      # proj weight
                    + 2 * D_pad * itemsize              # bias
                    + 2 * TB * D_pad * 4)               # output tile
        grid_spec = pltpu.PrefetchScalarGridSpec(
            num_scalar_prefetch=1,                                  # indices -> SMEM
            grid=(num_bt,),
            in_specs=[
                pl.BlockSpec(memory_space=pl.ANY),                      # table in HBM
                pl.BlockSpec((E_pad, D_pad), lambda i, ids: (0, 0)),    # proj weight
                pl.BlockSpec((1, D_pad), lambda i, ids: (0, 0)),        # proj bias
            ],
            out_specs=pl.BlockSpec((TB, D_pad), lambda i, ids: (i, 0)),
            scratch_shapes=[
                pltpu.VMEM((2, TB, E_pad), param_dtype),   # gather double buffer
                pltpu.VMEM((TB, E_pad), jnp.float32),      # pooled accumulator
                pltpu.SemaphoreType.DMA((2,)),             # one sem per slot
            ],
        )
        operands = (idx.reshape(B_pad * S),
                    params["table"], params["w"], params["b"])

    vmem_limit = int(min(_VMEM_CAP_BYTES, max(16 * 1024 * 1024, 2 * vmem_est)))
    out_pad = pl.pallas_call(
        kernel,
        out_shape=jax.ShapeDtypeStruct((B_pad, D_pad), jnp.float32),
        grid_spec=grid_spec,
        compiler_params=pltpu.CompilerParams(
            dimension_semantics=("parallel",),
            vmem_limit_bytes=vmem_limit),
    )(*operands)

    return out_pad[:B, :D]


def reference_forward(x_idx, emb_table, proj_w, proj_b):
    embs = jnp.take(emb_table, x_idx, axis=0)          # (B, S, E) == self.word_embs(x)
    pooled = embs.mean(axis=1)                         # 'ff' projector: mean-pool
    return jnp.tanh(pooled @ proj_w + proj_b)          # Linear + Tanh -> (B, img_dim)


if __name__ == "__main__":
    # Small synthetic shapes consistent with the module's forward pass.
    B, S = 2, 8            # batch of word-index sequences
    V = 50                 # vocabulary size
    E = 32                 # embedding_dim
    D = 64                 # img_dim (syntactic_dim)

    key = jax.random.PRNGKey(0)
    k_idx, k_tab, k_w, k_b = jax.random.split(key, 4)

    x_idx = jax.random.randint(k_idx, (B, S), 0, V, dtype=jnp.int32)
    emb_table = 0.02 * jax.random.normal(k_tab, (V, E), dtype=jnp.float32)
    proj_w = 0.1 * jax.random.normal(k_w, (E, D), dtype=jnp.float32)
    proj_b = 0.1 * jax.random.normal(k_b, (D,), dtype=jnp.float32)

    ref = reference_forward(x_idx, emb_table, proj_w, proj_b)

    # 1) Small-vocab fast path (table resident in VMEM, fused one-hot gather+pool).
    params_fast = prepare_imagenet_params(emb_table, proj_w, proj_b)
    assert params_fast["meta"]["use_vmem_table"]
    out_fast = jax.block_until_ready(imagenet_forward(x_idx, params_fast))
    assert out_fast.shape == (B, D)
    assert jnp.allclose(out_fast, ref, atol=1e-4, rtol=1e-4), "fast path mismatch"

    # 2) Large-vocab fallback (HBM table + chunked double-buffered DMA gather),
    #    forced here by zeroing the fast-path threshold.
    params_hbm = prepare_imagenet_params(emb_table, proj_w, proj_b,
                                         fast_path_table_bytes=0)
    assert not params_hbm["meta"]["use_vmem_table"]
    out_hbm = jax.block_until_ready(imagenet_forward(x_idx, params_hbm))
    assert jnp.allclose(out_hbm, ref, atol=1e-4, rtol=1e-4), "HBM gather path mismatch"

    # 3) bf16 parameters with f32 accumulation (fast MXU path): loose tolerance.
    params_bf16 = prepare_imagenet_params(emb_table, proj_w, proj_b,
                                          param_dtype=jnp.bfloat16)
    out_bf16 = jax.block_until_ready(imagenet_forward(x_idx, params_bf16))
    assert jnp.allclose(out_bf16, ref, atol=2e-2, rtol=2e-2), "bf16 path mismatch"

    print("KERNEL_OK")
</pallas_src>

<mosaic_0001>
module attributes {stable_mosaic.version = 11 : i64} {
  func.func @_vmem_table_kernel(%arg0: i32, %arg1: memref<64x1xi32, #tpu.memory_space<vmem>>, %arg2: memref<128x128xf32, #tpu.memory_space<vmem>>, %arg3: memref<128x128xf32, #tpu.memory_space<vmem>>, %arg4: memref<1x128xf32, #tpu.memory_space<vmem>>, %arg5: memref<8x128xf32, #tpu.memory_space<vmem>>) attributes {dimension_semantics = [#tpu.dimension_semantics<parallel>], iteration_bounds = array<i64: 1>, scalar_prefetch = 0 : i64, scratch_operands = 0 : i64, tpu.core_type = #tpu.core_type<tc>, window_params = [{transform_indices = @transform_0, window_bounds = array<i64: 64, 1>}, {pipeline_mode = #tpu.pipeline_mode<synchronous>, transform_indices = @transform_1, window_bounds = array<i64: 128, 128>}, {pipeline_mode = #tpu.pipeline_mode<synchronous>, transform_indices = @transform_2, window_bounds = array<i64: 128, 128>}, {pipeline_mode = #tpu.pipeline_mode<synchronous>, transform_indices = @transform_3, window_bounds = array<i64: 1, 128>}, {transform_indices = @transform_4, window_bounds = array<i64: 8, 128>}]} {
    %c0 = arith.constant 0 : index
    %c0_0 = arith.constant 0 : index
    %0 = vector.load %arg1[%c0, %c0_0] : memref<64x1xi32, #tpu.memory_space<vmem>>, vector<64x1xi32>
    %1 = tpu.iota {dimensions = array<i32: 1>} : vector<64x128xi32>
    %2 = vector.broadcast %0 : vector<64x1xi32> to vector<64x128xi32>
    %3 = arith.cmpi eq, %2, %1 : vector<64x128xi32>
    %4 = arith.extui %3 : vector<64x128xi1> to vector<64x128xi32>
    %5 = arith.sitofp %4 : vector<64x128xi32> to vector<64x128xf32>
    %6 = vector.shape_cast %5 : vector<64x128xf32> to vector<8x8x128xf32>
    %cst = arith.constant dense<0.000000e+00> : vector<8x128xf32>
    %7 = vector.multi_reduction <add>, %6, %cst [1] : vector<8x8x128xf32> to vector<8x128xf32>
    %c0_1 = arith.constant 0 : index
    %c0_2 = arith.constant 0 : index
    %8 = vector.load %arg2[%c0_1, %c0_2] : memref<128x128xf32, #tpu.memory_space<vmem>>, vector<128x128xf32>
    %cst_3 = arith.constant dense<0.000000e+00> : vector<8x128xf32>
    %9 = tpu.matmul %7, %8, %cst_3 {dimension_numbers = #tpu.dot_dimension_numbers<[1], [0], [0], [1], [0, 0, 1, 1], [], []>} : vector<8x128xf32>, vector<128x128xf32>, vector<8x128xf32> -> vector<8x128xf32>
    %cst_4 = arith.constant 1.250000e-01 : f32
    %10 = vector.broadcast %cst_4 : f32 to vector<8x128xf32>
    %11 = arith.mulf %9, %10 : vector<8x128xf32>
    %c0_5 = arith.constant 0 : index
    %c0_6 = arith.constant 0 : index
    %12 = vector.load %arg3[%c0_5, %c0_6] : memref<128x128xf32, #tpu.memory_space<vmem>>, vector<128x128xf32>
    %cst_7 = arith.constant dense<0.000000e+00> : vector<8x128xf32>
    %13 = tpu.matmul %11, %12, %cst_7 {dimension_numbers = #tpu.dot_dimension_numbers<[1], [0], [0], [1], [0, 0, 1, 1], [], []>} : vector<8x128xf32>, vector<128x128xf32>, vector<8x128xf32> -> vector<8x128xf32>
    %c0_8 = arith.constant 0 : index
    %c0_9 = arith.constant 0 : index
    %14 = vector.load %arg4[%c0_8, %c0_9] : memref<1x128xf32, #tpu.memory_space<vmem>>, vector<1x128xf32>
    %15 = vector.broadcast %14 : vector<1x128xf32> to vector<8x128xf32>
    %16 = arith.addf %13, %15 : vector<8x128xf32>
    %17 = math.tanh %16 : vector<8x128xf32>
    %c0_10 = arith.constant 0 : index
    %c0_11 = arith.constant 0 : index
    %18 = vector.load %arg5[%c0_10, %c0_11] : memref<8x128xf32, #tpu.memory_space<vmem>>, vector<8x128xf32>
    tpu.vector_store %arg5[%c0_10, %c0_11], %17 {strides = array<i32>} : memref<8x128xf32, #tpu.memory_space<vmem>>, vector<8x128xf32>,
    return
  }
  func.func @transform_0(%arg0: i32) -> (i32, i32) {
    %c0_i32 = arith.constant 0 : i32
    %c0_i32_0 = arith.constant 0 : i32
    return %arg0, %c0_i32 : i32, i32
  }
  func.func @transform_1(%arg0: i32) -> (i32, i32) {
    %c0_i32 = arith.constant 0 : i32
    %c0_i32_0 = arith.constant 0 : i32
    %c0_i32_1 = arith.constant 0 : i32
    return %c0_i32, %c0_i32_0 : i32, i32
  }
  func.func @transform_2(%arg0: i32) -> (i32, i32) {
    %c0_i32 = arith.constant 0 : i32
    %c0_i32_0 = arith.constant 0 : i32
    %c0_i32_1 = arith.constant 0 : i32
    return %c0_i32, %c0_i32_0 : i32, i32
  }
  func.func @transform_3(%arg0: i32) -> (i32, i32) {
    %c0_i32 = arith.constant 0 : i32
    %c0_i32_0 = arith.constant 0 : i32
    %c0_i32_1 = arith.constant 0 : i32
    return %c0_i32, %c0_i32_0 : i32, i32
  }
  func.func @transform_4(%arg0: i32) -> (i32, i32) {
    %c0_i32 = arith.constant 0 : i32
    %c0_i32_0 = arith.constant 0 : i32
    return %arg0, %c0_i32 : i32, i32
  }
}

</mosaic_0001>

<llo_original>
// kernel: tpu_custom_call.1
$region0: #{tpu_custom_call.1}
  #allocation0 [shape = 'u32[]', space=smem, size = 0x4, offset = 0x4, fixed_abs, tag = 'smem constant byte address 0x4 - core index']
  #allocation1 [shape = 'u32[144,128]{1,0:T(1,128)}', space=vmem, size = 0x12000, scoped, tag = 'internal scratch']
  %s0 = inlined_call_operand.vmem [shape: s32[64,1], index: 0, kind: input, shape index: {}]
  %s1 = inlined_call_operand.hbm [shape: f32[128,128], index: 1, kind: input, shape index: {}]
  %s2 = inlined_call_operand.hbm [shape: f32[128,128], index: 2, kind: input, shape index: {}]
  %s3 = inlined_call_operand.vmem [shape: f32[1,128], index: 3, kind: input, shape index: {}]
  %s4 = inlined_call_operand.hbm [shape: f32[8,128], index: 4, kind: output, shape index: {}]
  %s5 = sld [smem:[#allocation0]]
  $region34: #{tpu_custom_call.1} parent=0
    _
  %s7 = ssub.s32 1, %s5
  %s8 = scalar_select 0, %s7, %s5
  $region1: #{tpu_custom_call.1} parent=0
    #allocation2 [shape = 'u8[65536]{0}', space=vmem, size = 0x10000, scoped, tag = 'input window, operand 1, single buffered']
    #allocation3 [shape = 's32[1]{0}', space=sflag, size = 0x4, scoped, tag = 'scoped memory for tpu_custom_call.1']
    #allocation4 [shape = 's32[1]{0}', space=sflag, size = 0x4, scoped, tag = 'scoped memory for tpu_custom_call.1']
    #allocation5 [shape = 'u8[65536]{0}', space=vmem, size = 0x10000, scoped, tag = 'input window, operand 2, single buffered']
    #allocation6 [shape = 's32[1]{0}', space=sflag, size = 0x4, scoped, tag = 'scoped memory for tpu_custom_call.1']
    #allocation7 [shape = 'u8[4096]{0}', space=vmem, size = 0x1000, scoped, tag = 'output window, operand 0, single buffered']
    %9 = vsyncpa [#allocation3], 0
    %10 = vsyncpa [#allocation6], 0
    %11 = vsyncpa [#allocation4], 0
    // Predicated region
    $region2: #{tpu_custom_call.1} parent=1 // pred_check
      _
    $region3: #{tpu_custom_call.1} parent=1 // pred_check_branch
      %13 = sbr.rel (0) target = $region5
    $region4: #{tpu_custom_call.1} parent=1 // pred_region
      _
    $region5: #{tpu_custom_call.1} parent=1 // pred_fallthru
      _
    // Predicated region
    $region6: #{tpu_custom_call.1} parent=1 // pred_check
      _
    $region7: #{tpu_custom_call.1} parent=1 // pred_check_branch
      %15 = sbr.rel (0) target = $region9
    $region8: #{tpu_custom_call.1} parent=1 // pred_region
      %s17 = ssub.s32 2048, 2048
      %18 = vsyncadd [#allocation3], %s17
      %s19 = sshll.u32 [#allocation2], 4
      %s20 = int_to_ptr.vmem [resolvable:$true] %s19
      %25 = dma.hbm_to_vmem [thread:$0]  %s1, 2048, %s20, [#allocation3], 128, 128, 8
    $region9: #{tpu_custom_call.1} parent=1 // pred_fallthru
      _
    // Predicated region
    $region10: #{tpu_custom_call.1} parent=1 // pred_check
      _
    $region11: #{tpu_custom_call.1} parent=1 // pred_check_branch
      %27 = sbr.rel (0) target = $region13
    $region12: #{tpu_custom_call.1} parent=1 // pred_region
      %s29 = ssub.s32 2048, 2048
      %30 = vsyncadd [#allocation6], %s29
      %s31 = sshll.u32 [#allocation5], 4
      %s32 = int_to_ptr.vmem [resolvable:$true] %s31
      %37 = dma.hbm_to_vmem [thread:$0]  %s2, 2048, %s32, [#allocation6], 128, 128, 8
    $region13: #{tpu_custom_call.1} parent=1 // pred_fallthru
      _
    // Predicated region
    $region14: #{tpu_custom_call.1} parent=1 // pred_check
      _
    $region15: #{tpu_custom_call.1} parent=1 // pred_check_branch
      %39 = sbr.rel (0) target = $region17
    $region16: #{tpu_custom_call.1} parent=1 // pred_region
      _
    $region17: #{tpu_custom_call.1} parent=1 // pred_fallthru
      _
    // Predicated region
    $region18: #{tpu_custom_call.1} parent=1 // pred_check
      _
    $region19: #{tpu_custom_call.1} parent=1 // pred_check_branch
      %41 = sbr.rel (0) target = $region21
    $region20: #{tpu_custom_call.1} parent=1 // pred_region
      %42 = dma.done [#allocation3], 2048
    $region21: #{tpu_custom_call.1} parent=1 // pred_fallthru
      _
    // Predicated region
    $region22: #{tpu_custom_call.1} parent=1 // pred_check
      _
    $region23: #{tpu_custom_call.1} parent=1 // pred_check_branch
      %44 = sbr.rel (0) target = $region25
    $region24: #{tpu_custom_call.1} parent=1 // pred_region
      %45 = dma.done [#allocation6], 2048
    $region25: #{tpu_custom_call.1} parent=1 // pred_fallthru
      _
    %v46 = vld [vmem:[%s0] sm:$0xff]
    %v47 = vld [vmem:[%s0 + $0x8] sm:$0xff]
    %v48 = vld [vmem:[%s0 + $0x10] sm:$0xff]
    %v49 = vld [vmem:[%s0 + $0x18] sm:$0xff]
    %v50 = vld [vmem:[%s0 + $0x20] sm:$0xff]
    %v51 = vld [vmem:[%s0 + $0x28] sm:$0xff]
    %v52 = vld [vmem:[%s0 + $0x30] sm:$0xff]
    %v53 = vld [vmem:[%s0 + $0x38] sm:$0xff]
    %v54 = vlaneseq
    %v55 = vand.u32 %v54, 127
    %56 = vset.pattern.permute.xlu0 0
    %57 = vperm.xlu0 %56, %v46
    %v58 = vpop.permute.xlu0 %57
    %59 = vset.pattern.permute.xlu0 0
    %60 = vperm.xlu0 %59, %v47
    %v61 = vpop.permute.xlu0 %60
    %62 = vset.pattern.permute.xlu0 0
    %63 = vperm.xlu0 %62, %v48
    %v64 = vpop.permute.xlu0 %63
    %65 = vset.pattern.permute.xlu0 0
    %66 = vperm.xlu0 %65, %v49
    %v67 = vpop.permute.xlu0 %66
    %68 = vset.pattern.permute.xlu0 0
    %69 = vperm.xlu0 %68, %v50
    %v70 = vpop.permute.xlu0 %69
    %71 = vset.pattern.permute.xlu0 0
    %72 = vperm.xlu0 %71, %v51
    %v73 = vpop.permute.xlu0 %72
    %74 = vset.pattern.permute.xlu0 0
    %75 = vperm.xlu0 %74, %v52
    %v76 = vpop.permute.xlu0 %75
    %77 = vset.pattern.permute.xlu0 0
    %78 = vperm.xlu0 %77, %v53
    %v79 = vpop.permute.xlu0 %78
    %vm80 = vcmp.eq.s32.totalorder %v58, %v55
    %vm81 = vcmp.eq.s32.totalorder %v61, %v55
    %vm82 = vcmp.eq.s32.totalorder %v64, %v55
    %vm83 = vcmp.eq.s32.totalorder %v67, %v55
    %vm84 = vcmp.eq.s32.totalorder %v70, %v55
    %vm85 = vcmp.eq.s32.totalorder %v73, %v55
    %vm86 = vcmp.eq.s32.totalorder %v76, %v55
    %vm87 = vcmp.eq.s32.totalorder %v79, %v55
    %v88 = vsel %vm80, 1, 0
    %v89 = vsel %vm81, 1, 0
    %v90 = vsel %vm82, 1, 0
    %v91 = vsel %vm83, 1, 0
    %v92 = vsel %vm84, 1, 0
    %v93 = vsel %vm85, 1, 0
    %v94 = vsel %vm86, 1, 0
    %v95 = vsel %vm87, 1, 0
    %v96 = vcvt.s32.f32 %v88
    %v97 = vcvt.s32.f32 %v89
    %v98 = vcvt.s32.f32 %v90
    %v99 = vcvt.s32.f32 %v91
    %v100 = vcvt.s32.f32 %v92
    %v101 = vcvt.s32.f32 %v93
    %v102 = vcvt.s32.f32 %v94
    %v103 = vcvt.s32.f32 %v95
    %v104 = vrot.slane %v96, 4
    %v105 = vadd.f32 %v96, %v104
    %v106 = vrot.slane %v105, 2
    %v107 = vadd.f32 %v105, %v106
    %v108 = vrot.slane %v107, 1
    %v109 = vadd.f32 %v107, %v108
    %v110 = vrot.slane %v97, 4
    %v111 = vadd.f32 %v97, %v110
    %v112 = vrot.slane %v111, 2
    %v113 = vadd.f32 %v111, %v112
    %v114 = vrot.slane %v113, 1
    %v115 = vadd.f32 %v113, %v114
    %v116 = vrot.slane %v98, 4
    %v117 = vadd.f32 %v98, %v116
    %v118 = vrot.slane %v117, 2
    %v119 = vadd.f32 %v117, %v118
    %v120 = vrot.slane %v119, 1
    %v121 = vadd.f32 %v119, %v120
    %v122 = vrot.slane %v99, 4
    %v123 = vadd.f32 %v99, %v122
    %v124 = vrot.slane %v123, 2
    %v125 = vadd.f32 %v123, %v124
    %v126 = vrot.slane %v125, 1
    %v127 = vadd.f32 %v125, %v126
    %v128 = vrot.slane %v100, 4
    %v129 = vadd.f32 %v100, %v128
    %v130 = vrot.slane %v129, 2
    %v131 = vadd.f32 %v129, %v130
    %v132 = vrot.slane %v131, 1
    %v133 = vadd.f32 %v131, %v132
    %v134 = vrot.slane %v101, 4
    %v135 = vadd.f32 %v101, %v134
    %v136 = vrot.slane %v135, 2
    %v137 = vadd.f32 %v135, %v136
    %v138 = vrot.slane %v137, 1
    %v139 = vadd.f32 %v137, %v138
    %v140 = vrot.slane %v102, 4
    %v141 = vadd.f32 %v102, %v140
    %v142 = vrot.slane %v141, 2
    %v143 = vadd.f32 %v141, %v142
    %v144 = vrot.slane %v143, 1
    %v145 = vadd.f32 %v143, %v144
    %v146 = vrot.slane %v103, 4
    %v147 = vadd.f32 %v103, %v146
    %v148 = vrot.slane %v147, 2
    %v149 = vadd.f32 %v147, %v148
    %v150 = vrot.slane %v149, 1
    %v151 = vadd.f32 %v149, %v150
    %v152 = vld [vmem:[#allocation2] sm:$0xff]
    %v153 = vld [vmem:[#allocation2 + $0x8] sm:$0xff]
    %v154 = vld [vmem:[#allocation2 + $0x10] sm:$0xff]
    %v155 = vld [vmem:[#allocation2 + $0x18] sm:$0xff]
    %v156 = vld [vmem:[#allocation2 + $0x20] sm:$0xff]
    %v157 = vld [vmem:[#allocation2 + $0x28] sm:$0xff]
    %v158 = vld [vmem:[#allocation2 + $0x30] sm:$0xff]
    %v159 = vld [vmem:[#allocation2 + $0x38] sm:$0xff]
    %v160 = vld [vmem:[#allocation2 + $0x40] sm:$0xff]
    %v161 = vld [vmem:[#allocation2 + $0x48] sm:$0xff]
    %v162 = vld [vmem:[#allocation2 + $0x50] sm:$0xff]
    %v163 = vld [vmem:[#allocation2 + $0x58] sm:$0xff]
    %v164 = vld [vmem:[#allocation2 + $0x60] sm:$0xff]
    %v165 = vld [vmem:[#allocation2 + $0x68] sm:$0xff]
    %v166 = vld [vmem:[#allocation2 + $0x70] sm:$0xff]
    %v167 = vld [vmem:[#allocation2 + $0x78] sm:$0xff]
    %vm176 = vcmask 1041409
    %v177 = vsel %vm176, %v115, %v109
    %vm178 = vcmask 1042434
    %v179 = vsel %vm178, %v121, %v177
    %vm180 = vcmask 1043459
    %v181 = vsel %vm180, %v127, %v179
    %vm182 = vcmask 1044484
    %v183 = vsel %vm182, %v133, %v181
    %vm184 = vcmask 1045509
    %v185 = vsel %vm184, %v139, %v183
    %vm186 = vcmask 1046534
    %v187 = vsel %vm186, %v145, %v185
    %vm188 = vcmask 1047559
    %v189 = vsel %vm188, %v151, %v187
    %191 = vmatprep.subr.mxu0 0.0
    %192 = vmatpush1.msra.mxu0 %v152
    %193 = vmatprep.subr.mxu0 0.0
    %194 = vmatpush1.msra.mxu0 %v153
    %195 = vmatprep.subr.mxu0 0.0
    %196 = vmatpush1.msra.mxu0 %v154
    %197 = vmatprep.subr.mxu0 0.0
    %198 = vmatpush1.msra.mxu0 %v155
    %199 = vmatprep.subr.mxu0 0.0
    %200 = vmatpush1.msra.mxu0 %v156
    %201 = vmatprep.subr.mxu0 0.0
    %202 = vmatpush1.msra.mxu0 %v157
    %203 = vmatprep.subr.mxu0 0.0
    %204 = vmatpush1.msra.mxu0 %v158
    %205 = vmatprep.subr.mxu0 0.0
    %206 = vmatpush1.msra.mxu0 %v159
    %207 = vmatprep.subr.mxu0 0.0
    %208 = vmatpush1.msra.mxu0 %v160
    %209 = vmatprep.subr.mxu0 0.0
    %210 = vmatpush1.msra.mxu0 %v161
    %211 = vmatprep.subr.mxu0 0.0
    %212 = vmatpush1.msra.mxu0 %v162
    %213 = vmatprep.subr.mxu0 0.0
    %214 = vmatpush1.msra.mxu0 %v163
    %215 = vmatprep.subr.mxu0 0.0
    %216 = vmatpush1.msra.mxu0 %v164
    %217 = vmatprep.subr.mxu0 0.0
    %218 = vmatpush1.msra.mxu0 %v165
    %219 = vmatprep.subr.mxu0 0.0
    %220 = vmatpush1.msra.mxu0 %v166
    %221 = vmatprep.subr.mxu0 0.0
    %222 = vmatpush1.msra.mxu0 %v167
    %223 = vmatprep.subr.mxu0 0.0
    %224 = vmatpush1.msra.mxu0 0.0
    %225 = vmatprep.subr.mxu0 0.0
    %226 = vmatpush1.msra.mxu0 0.0
    %227 = vmatprep.subr.mxu0 0.0
    %228 = vmatpush1.msra.mxu0 0.0
    %229 = vmatprep.subr.mxu0 0.0
    %230 = vmatpush1.msra.mxu0 0.0
    %231 = vmatprep.subr.mxu0 0.0
    %232 = vmatpush1.msra.mxu0 0.0
    %233 = vmatprep.subr.mxu0 0.0
    %234 = vmatpush1.msra.mxu0 0.0
    %235 = vmatprep.subr.mxu0 0.0
    %236 = vmatpush1.msra.mxu0 0.0
    %237 = vmatprep.subr.mxu0 0.0
    %238 = vmatpush1.msra.mxu0 0.0
    %239 = vmatprep.subr.mxu0 0.0
    %240 = vmatpush1.msra.mxu0 0.0
    %241 = vmatprep.subr.mxu0 0.0
    %242 = vmatpush1.msra.mxu0 0.0
    %243 = vmatprep.subr.mxu0 0.0
    %244 = vmatpush1.msra.mxu0 0.0
    %245 = vmatprep.subr.mxu0 0.0
    %246 = vmatpush1.msra.mxu0 0.0
    %247 = vmatprep.subr.mxu0 0.0
    %248 = vmatpush1.msra.mxu0 0.0
    %249 = vmatprep.subr.mxu0 0.0
    %250 = vmatpush1.msra.mxu0 0.0
    %251 = vmatprep.subr.mxu0 0.0
    %252 = vmatpush1.msra.mxu0 0.0
    %253 = vmatprep.subr.mxu0 0.0
    %254 = vmatpush1.msra.mxu0 0.0
    %255 = vmatprep.mubr.f32.mxu0 0.0
    %256 = vmatmul.mubr.f32.gmra.mrb[0].mxu0 %v189
    %v257 = vpop.f32.mrb[0].mxu0
    %v258 = vadd.f32 0.0, %v257
    %v259 = vpop.f32.mrb[0].mxu0
    %260 = vdwg.mxu0
    %v261 = vmul.f32 %v258, 0.125
    %v262 = vld [vmem:[#allocation5] sm:$0xff]
    %v263 = vld [vmem:[#allocation5 + $0x8] sm:$0xff]
    %v264 = vld [vmem:[#allocation5 + $0x10] sm:$0xff]
    %v265 = vld [vmem:[#allocation5 + $0x18] sm:$0xff]
    %v266 = vld [vmem:[#allocation5 + $0x20] sm:$0xff]
    %v267 = vld [vmem:[#allocation5 + $0x28] sm:$0xff]
    %v268 = vld [vmem:[#allocation5 + $0x30] sm:$0xff]
    %v269 = vld [vmem:[#allocation5 + $0x38] sm:$0xff]
    %v270 = vld [vmem:[#allocation5 + $0x40] sm:$0xff]
    %v271 = vld [vmem:[#allocation5 + $0x48] sm:$0xff]
    %v272 = vld [vmem:[#allocation5 + $0x50] sm:$0xff]
    %v273 = vld [vmem:[#allocation5 + $0x58] sm:$0xff]
    %v274 = vld [vmem:[#allocation5 + $0x60] sm:$0xff]
    %v275 = vld [vmem:[#allocation5 + $0x68] sm:$0xff]
    %v276 = vld [vmem:[#allocation5 + $0x70] sm:$0xff]
    %v277 = vld [vmem:[#allocation5 + $0x78] sm:$0xff]
    %v278 = vld [vmem:[%s3] sm:$0x1]
    %v280 = vlaneseq
    %v281 = vshrl.u32 %v280, 7
    %v282 = vsub.s32 0, %v281
    %v283 = vrot.slane %v278, %v282
    %285 = vmatprep.subr.mxu0 0.0
    %286 = vmatpush1.msra.mxu0 %v262
    %287 = vmatprep.subr.mxu0 0.0
    %288 = vmatpush1.msra.mxu0 %v263
    %289 = vmatprep.subr.mxu0 0.0
    %290 = vmatpush1.msra.mxu0 %v264
    %291 = vmatprep.subr.mxu0 0.0
    %292 = vmatpush1.msra.mxu0 %v265
    %293 = vmatprep.subr.mxu0 0.0
    %294 = vmatpush1.msra.mxu0 %v266
    %295 = vmatprep.subr.mxu0 0.0
    %296 = vmatpush1.msra.mxu0 %v267
    %297 = vmatprep.subr.mxu0 0.0
    %298 = vmatpush1.msra.mxu0 %v268
    %299 = vmatprep.subr.mxu0 0.0
    %300 = vmatpush1.msra.mxu0 %v269
    %301 = vmatprep.subr.mxu0 0.0
    %302 = vmatpush1.msra.mxu0 %v270
    %303 = vmatprep.subr.mxu0 0.0
    %304 = vmatpush1.msra.mxu0 %v271
    %305 = vmatprep.subr.mxu0 0.0
    %306 = vmatpush1.msra.mxu0 %v272
    %307 = vmatprep.subr.mxu0 0.0
    %308 = vmatpush1.msra.mxu0 %v273
    %309 = vmatprep.subr.mxu0 0.0
    %310 = vmatpush1.msra.mxu0 %v274
    %311 = vmatprep.subr.mxu0 0.0
    %312 = vmatpush1.msra.mxu0 %v275
    %313 = vmatprep.subr.mxu0 0.0
    %314 = vmatpush1.msra.mxu0 %v276
    %315 = vmatprep.subr.mxu0 0.0
    %316 = vmatpush1.msra.mxu0 %v277
    %317 = vmatprep.subr.mxu0 0.0
    %318 = vmatpush1.msra.mxu0 0.0
    %319 = vmatprep.subr.mxu0 0.0
    %320 = vmatpush1.msra.mxu0 0.0
    %321 = vmatprep.subr.mxu0 0.0
    %322 = vmatpush1.msra.mxu0 0.0
    %323 = vmatprep.subr.mxu0 0.0
    %324 = vmatpush1.msra.mxu0 0.0
    %325 = vmatprep.subr.mxu0 0.0
    %326 = vmatpush1.msra.mxu0 0.0
    %327 = vmatprep.subr.mxu0 0.0
    %328 = vmatpush1.msra.mxu0 0.0
    %329 = vmatprep.subr.mxu0 0.0
    %330 = vmatpush1.msra.mxu0 0.0
    %331 = vmatprep.subr.mxu0 0.0
    %332 = vmatpush1.msra.mxu0 0.0
    %333 = vmatprep.subr.mxu0 0.0
    %334 = vmatpush1.msra.mxu0 0.0
    %335 = vmatprep.subr.mxu0 0.0
    %336 = vmatpush1.msra.mxu0 0.0
    %337 = vmatprep.subr.mxu0 0.0
    %338 = vmatpush1.msra.mxu0 0.0
    %339 = vmatprep.subr.mxu0 0.0
    %340 = vmatpush1.msra.mxu0 0.0
    %341 = vmatprep.subr.mxu0 0.0
    %342 = vmatpush1.msra.mxu0 0.0
    %343 = vmatprep.subr.mxu0 0.0
    %344 = vmatpush1.msra.mxu0 0.0
    %345 = vmatprep.subr.mxu0 0.0
    %346 = vmatpush1.msra.mxu0 0.0
    %347 = vmatprep.subr.mxu0 0.0
    %348 = vmatpush1.msra.mxu0 0.0
    %349 = vmatprep.mubr.f32.mxu0 0.0
    %350 = vmatmul.mubr.f32.gmra.mrb[0].mxu0 %v261
    %v351 = vpop.f32.mrb[0].mxu0
    %v352 = vadd.f32 %v283, %v351
    %v353 = vpop.f32.mrb[0].mxu0
    %354 = vdwg.mxu0
    %v355 = vtanh.pop %v352
    %356 = vst [vmem:[#allocation7] sm:$0xff] %v355
    // Predicated region
    $region26: #{tpu_custom_call.1} parent=1 // pred_check
      _
    $region27: #{tpu_custom_call.1} parent=1 // pred_check_branch
      %358 = sbr.rel (0) target = $region29
    $region28: #{tpu_custom_call.1} parent=1 // pred_region
      %s360 = ssub.s32 128, 128
      %361 = vsyncadd [#allocation4], %s360
      %s363 = sshll.u32 [#allocation7], 4
      %s364 = int_to_ptr.vmem [resolvable:$true] %s363
      %366 = dma.vmem_to_hbm [thread:$0]  %s364, 128, %s4, [#allocation4]
    $region29: #{tpu_custom_call.1} parent=1 // pred_fallthru
      _
    // Predicated region
    $region30: #{tpu_custom_call.1} parent=1 // pred_check
      _
    $region31: #{tpu_custom_call.1} parent=1 // pred_check_branch
      %368 = sbr.rel (0) target = $region33
    $region32: #{tpu_custom_call.1} parent=1 // pred_region
      %369 = dma.done [#allocation4], 128
    $region33: #{tpu_custom_call.1} parent=1 // pred_fallthru
      _
    %370 = vsyncpa [#allocation3], 1
    %371 = vsyncpa [#allocation6], 1
    %372 = vsyncpa [#allocation4], 1

</llo_original>
